<compile_context>
chip_gen: v7x
topology: tpu7x:2x2x1
jax: 0.10.0
libtpu: 0.0.40
codegen_flags: <defaults>
</compile_context>

<pallas_src>
import numpy as np

import jax
import jax.numpy as jnp
from jax.experimental import pallas as pl
from jax.experimental.pallas import tpu as pltpu


def _spatial_attention_kernel(x_ref, am_ref, ax_ref, o_ref):
    """One batch tile per grid step.

    x_ref:  (TB, C, HW)  input block — pixels on the lane dim
    am_ref: (HW, HW)     conv-as-matmul operator for the mean-pooled channel
    ax_ref: (HW, HW)     conv-as-matmul operator for the max-pooled channel
    o_ref:  (TB, HW)     sigmoid(conv) output (lane-dense)
    """
    x = x_ref[...].astype(jnp.float32)                      # (TB, C, HW)

    # Channel pooling, kept in f32 (v5e-friendly elementwise math).
    p_mean = jnp.mean(x, axis=1)                            # (TB, HW)
    p_max = jnp.max(x, axis=1)                              # (TB, HW)

    # 7x7 conv (pad=3, no bias) as two accumulating MXU matmuls — no lane
    # concat.  Operand dtype follows the operator dtype (f32 or bf16);
    # accumulation is always f32.
    mm_dtype = am_ref.dtype
    conv = jnp.dot(p_mean.astype(mm_dtype), am_ref[...],
                   preferred_element_type=jnp.float32)      # (TB, HW)
    conv = conv + jnp.dot(p_max.astype(mm_dtype), ax_ref[...],
                          preferred_element_type=jnp.float32)
    o_ref[...] = jax.nn.sigmoid(conv)


def build_conv_operators(conv_w, H, W):
    """Fold the (1, 2, K, K) conv weight into two dense (H*W, H*W) operators.

    conv[b, oy*W+ox] = sum_{ky,kx} w[0,0,ky,kx] * p_mean[b, (oy+ky-pad)*W+(ox+kx-pad)]
                     + sum_{ky,kx} w[0,1,ky,kx] * p_max [b, ...]
    with zero padding baked in.  Weight-only and static — built ONCE on the
    host with numpy so nothing runs on-device per forward call.
    """
    w = np.asarray(conv_w, dtype=np.float32)                # (1, 2, K, K)
    _, C, K, _ = w.shape
    assert C == 2
    pad = (K - 1) // 2
    HW = H * W

    oy, ox, ky, kx = np.meshgrid(np.arange(H), np.arange(W),
                                 np.arange(K), np.arange(K), indexing="ij")
    sy = oy + ky - pad
    sx = ox + kx - pad
    valid = (sy >= 0) & (sy < H) & (sx >= 0) & (sx < W)
    src = (np.clip(sy, 0, H - 1) * W + np.clip(sx, 0, W - 1)).ravel()
    dst = (oy * W + ox).ravel()

    ops = np.zeros((C, HW, HW), np.float32)
    for c in range(C):
        vals = np.where(valid, w[0, c, ky, kx], 0.0).ravel()
        np.add.at(ops[c], (src, dst), vals)
    return jnp.asarray(ops[0]), jnp.asarray(ops[1])


def module_sa_forward(x_nchw, a_mean, a_max, *,
                      matmul_dtype=jnp.bfloat16, batch_tile=256):
    """x_nchw: (N, C, H, W) f32 (PyTorch layout).
    a_mean/a_max: (H*W, H*W) host-built conv operators (see build_conv_operators).
    Returns (N, 1, H, W) f32, matching Module_SA.forward."""
    N, C, H, W = x_nchw.shape
    HW = H * W
    assert a_mean.shape == (HW, HW) and a_max.shape == (HW, HW)

    # Batch tile = M dimension of the matmul.  For small N the whole batch is
    # a single grid step; for large N use 256-row tiles (fills v6e/v7x MXU).
    tb = N if N <= batch_tile else batch_tile
    assert N % tb == 0  # TODO(synk): ragged last batch tile (pad/mask) if ever needed.

    x = x_nchw.reshape(N, C, HW).astype(jnp.float32)        # free reshape, no transpose
    a_mean = a_mean.astype(matmul_dtype)
    a_max = a_max.astype(matmul_dtype)

    out = pl.pallas_call(
        _spatial_attention_kernel,
        out_shape=jax.ShapeDtypeStruct((N, HW), jnp.float32),
        grid=(pl.cdiv(N, tb),),
        in_specs=[
            pl.BlockSpec((tb, C, HW), lambda b: (b, 0, 0)),
            # Constant index_map: operators stay resident in VMEM across steps.
            pl.BlockSpec((HW, HW), lambda b: (0, 0)),
            pl.BlockSpec((HW, HW), lambda b: (0, 0)),
        ],
        out_specs=pl.BlockSpec((tb, HW), lambda b: (b, 0)),
        compiler_params=pltpu.CompilerParams(
            dimension_semantics=("parallel",)),
    )(x, a_mean, a_max)

    return out.reshape(N, 1, H, W)


def _reference(x_nchw, conv_w):
    """Plain-JAX reference matching the PyTorch module."""
    p1 = jnp.mean(x_nchw, axis=1, keepdims=True)
    p2 = jnp.max(x_nchw, axis=1, keepdims=True)
    pooled = jnp.concatenate([p1, p2], axis=1)
    K = conv_w.shape[-1]
    pad = (K - 1) // 2
    conv = jax.lax.conv_general_dilated(
        pooled, conv_w, window_strides=(1, 1),
        padding=[(pad, pad), (pad, pad)],
        precision=jax.lax.Precision.HIGHEST)
    return jax.nn.sigmoid(conv)


if __name__ == "__main__":
    # Shapes consistent with Module_SA: batch=2, channels=4, spatial=16x16,
    # conv1 weight (1, 2, 7, 7), padding=3, bias=False.
    N, C, H, W = 2, 4, 16, 16
    K = 7

    key = jax.random.PRNGKey(0)
    kx_, kw_ = jax.random.split(key)
    x = jax.random.normal(kx_, (N, C, H, W), jnp.float32)
    w = 0.1 * jax.random.normal(kw_, (1, 2, K, K), jnp.float32)

    # Host-built, weight-only operators (outside the hot path).
    a_mean, a_max = build_conv_operators(w, H, W)

    ref = _reference(x, w)

    # f32 matmul operands: tight check against the HIGHEST-precision reference.
    out_f32 = jax.block_until_ready(
        module_sa_forward(x, a_mean, a_max, matmul_dtype=jnp.float32))
    assert out_f32.shape == (N, 1, H, W)
    err_f32 = float(jnp.max(jnp.abs(out_f32 - ref)))
    assert err_f32 < 1e-3, f"f32 max abs err {err_f32}"

    # bf16 matmul operands (MXU-native, recommended on v6e/v7x): bf16-level
    # rounding of the operands is accepted with a correspondingly looser bound.
    out_bf16 = jax.block_until_ready(
        module_sa_forward(x, a_mean, a_max, matmul_dtype=jnp.bfloat16))
    err_bf16 = float(jnp.max(jnp.abs(out_bf16 - ref)))
    assert err_bf16 < 1e-2, f"bf16 max abs err {err_bf16}"

    print("KERNEL_OK")
</pallas_src>

<mosaic_0001>
module attributes {stable_mosaic.version = 11 : i64} {
  func.func @_spatial_attention_kernel(%arg0: i32, %arg1: memref<2x4x256xf32, #tpu.memory_space<vmem>>, %arg2: memref<256x256xf32, #tpu.memory_space<vmem>>, %arg3: memref<256x256xf32, #tpu.memory_space<vmem>>, %arg4: memref<2x256xf32, #tpu.memory_space<vmem>>) attributes {dimension_semantics = [#tpu.dimension_semantics<parallel>], iteration_bounds = array<i64: 1>, scalar_prefetch = 0 : i64, scratch_operands = 0 : i64, tpu.core_type = #tpu.core_type<tc>, window_params = [{transform_indices = @transform_0, window_bounds = array<i64: 2, 4, 256>}, {pipeline_mode = #tpu.pipeline_mode<synchronous>, transform_indices = @transform_1, window_bounds = array<i64: 256, 256>}, {pipeline_mode = #tpu.pipeline_mode<synchronous>, transform_indices = @transform_2, window_bounds = array<i64: 256, 256>}, {transform_indices = @transform_3, window_bounds = array<i64: 2, 256>}]} {
    %c0 = arith.constant 0 : index
    %c0_0 = arith.constant 0 : index
    %c0_1 = arith.constant 0 : index
    %0 = vector.load %arg1[%c0, %c0_0, %c0_1] : memref<2x4x256xf32, #tpu.memory_space<vmem>>, vector<2x4x256xf32>
    %cst = arith.constant dense<0.000000e+00> : vector<2x256xf32>
    %1 = vector.multi_reduction <add>, %0, %cst [1] : vector<2x4x256xf32> to vector<2x256xf32>
    %cst_2 = arith.constant 4.000000e+00 : f32
    %2 = vector.broadcast %cst_2 : f32 to vector<2x256xf32>
    %3 = arith.divf %1, %2 : vector<2x256xf32>
    %cst_3 = arith.constant dense<0xFF800000> : vector<2x256xf32>
    %4 = vector.multi_reduction <maximumf>, %0, %cst_3 [1] : vector<2x4x256xf32> to vector<2x256xf32>
    %c0_4 = arith.constant 0 : index
    %c0_5 = arith.constant 0 : index
    %5 = vector.load %arg2[%c0_4, %c0_5] : memref<256x256xf32, #tpu.memory_space<vmem>>, vector<256x256xf32>
    %cst_6 = arith.constant dense<0.000000e+00> : vector<2x256xf32>
    %6 = tpu.matmul %3, %5, %cst_6 {dimension_numbers = #tpu.dot_dimension_numbers<[1], [0], [0], [1], [0, 0, 1, 1], [], []>} : vector<2x256xf32>, vector<256x256xf32>, vector<2x256xf32> -> vector<2x256xf32>
    %c0_7 = arith.constant 0 : index
    %c0_8 = arith.constant 0 : index
    %7 = vector.load %arg3[%c0_7, %c0_8] : memref<256x256xf32, #tpu.memory_space<vmem>>, vector<256x256xf32>
    %cst_9 = arith.constant dense<0.000000e+00> : vector<2x256xf32>
    %8 = tpu.matmul %4, %7, %cst_9 {dimension_numbers = #tpu.dot_dimension_numbers<[1], [0], [0], [1], [0, 0, 1, 1], [], []>} : vector<2x256xf32>, vector<256x256xf32>, vector<2x256xf32> -> vector<2x256xf32>
    %9 = arith.addf %6, %8 : vector<2x256xf32>
    %10 = arith.negf %9 : vector<2x256xf32>
    %11 = math.exp %10 : vector<2x256xf32>
    %cst_10 = arith.constant 1.000000e+00 : f32
    %12 = vector.broadcast %cst_10 : f32 to vector<2x256xf32>
    %13 = arith.addf %12, %11 : vector<2x256xf32>
    %14 = arith.divf %12, %13 : vector<2x256xf32>
    %c0_11 = arith.constant 0 : index
    %c0_12 = arith.constant 0 : index
    %15 = vector.load %arg4[%c0_11, %c0_12] : memref<2x256xf32, #tpu.memory_space<vmem>>, vector<2x256xf32>
    tpu.vector_store %arg4[%c0_11, %c0_12], %14 {strides = array<i32>} : memref<2x256xf32, #tpu.memory_space<vmem>>, vector<2x256xf32>,
    return
  }
  func.func @transform_0(%arg0: i32) -> (i32, i32, i32) {
    %c0_i32 = arith.constant 0 : i32
    %c0_i32_0 = arith.constant 0 : i32
    %c0_i32_1 = arith.constant 0 : i32
    return %arg0, %c0_i32, %c0_i32_0 : i32, i32, i32
  }
  func.func @transform_1(%arg0: i32) -> (i32, i32) {
    %c0_i32 = arith.constant 0 : i32
    %c0_i32_0 = arith.constant 0 : i32
    %c0_i32_1 = arith.constant 0 : i32
    return %c0_i32, %c0_i32_0 : i32, i32
  }
  func.func @transform_2(%arg0: i32) -> (i32, i32) {
    %c0_i32 = arith.constant 0 : i32
    %c0_i32_0 = arith.constant 0 : i32
    %c0_i32_1 = arith.constant 0 : i32
    return %c0_i32, %c0_i32_0 : i32, i32
  }
  func.func @transform_3(%arg0: i32) -> (i32, i32) {
    %c0_i32 = arith.constant 0 : i32
    %c0_i32_0 = arith.constant 0 : i32
    return %arg0, %c0_i32 : i32, i32
  }
}

</mosaic_0001>

<llo_original>
// kernel: tpu_custom_call.1
$region0: #{tpu_custom_call.1}
  #allocation0 [shape = 'u32[]', space=smem, size = 0x4, offset = 0x4, fixed_abs, tag = 'smem constant byte address 0x4 - core index']
  #allocation1 [shape = 'u32[144,128]{1,0:T(1,128)}', space=vmem, size = 0x12000, scoped, tag = 'internal scratch']
  %s0 = inlined_call_operand.hbm [shape: f32[2,4,256], index: 0, kind: input, shape index: {}]
  %s1 = inlined_call_operand.hbm [shape: f32[256,256], index: 1, kind: input, shape index: {}]
  %s2 = inlined_call_operand.hbm [shape: f32[256,256], index: 2, kind: input, shape index: {}]
  %s3 = inlined_call_operand.hbm [shape: f32[2,256], index: 3, kind: output, shape index: {}]
  %s4 = sld [smem:[#allocation0]]
  $region34: #{tpu_custom_call.1} parent=0
    _
  %s6 = ssub.s32 1, %s4
  %s7 = scalar_select 0, %s6, %s4
  $region1: #{tpu_custom_call.1} parent=0
    #allocation2 [shape = 'u8[8192]{0}', space=vmem, size = 0x2000, scoped, tag = 'input window, operand 0, single buffered']
    #allocation3 [shape = 's32[1]{0}', space=sflag, size = 0x4, scoped, tag = 'scoped memory for tpu_custom_call.1']
    #allocation4 [shape = 's32[1]{0}', space=sflag, size = 0x4, scoped, tag = 'scoped memory for tpu_custom_call.1']
    #allocation5 [shape = 'u8[262144]{0}', space=vmem, size = 0x40000, scoped, tag = 'input window, operand 1, single buffered']
    #allocation6 [shape = 's32[1]{0}', space=sflag, size = 0x4, scoped, tag = 'scoped memory for tpu_custom_call.1']
    #allocation7 [shape = 'u8[262144]{0}', space=vmem, size = 0x40000, scoped, tag = 'input window, operand 2, single buffered']
    #allocation8 [shape = 'u8[2048]{0}', space=vmem, size = 0x800, scoped, tag = 'output window, operand 0, single buffered']
    %8 = vsyncpa [#allocation3], 0
    %9 = vsyncpa [#allocation6], 0
    %10 = vsyncpa [#allocation4], 0
    // Predicated region
    $region2: #{tpu_custom_call.1} parent=1 // pred_check
      _
    $region3: #{tpu_custom_call.1} parent=1 // pred_check_branch
      %12 = sbr.rel (0) target = $region5
    $region4: #{tpu_custom_call.1} parent=1 // pred_region
      %s14 = ssub.s32 256, 256
      %15 = vsyncadd [#allocation3], %s14
      %s16 = sshll.u32 [#allocation2], 4
      %s17 = int_to_ptr.vmem [resolvable:$true] %s16
      %22 = dma.hbm_to_vmem [thread:$0]  %s0, 256, %s17, [#allocation3], 128, 128, 8
    $region5: #{tpu_custom_call.1} parent=1 // pred_fallthru
      _
    // Predicated region
    $region6: #{tpu_custom_call.1} parent=1 // pred_check
      _
    $region7: #{tpu_custom_call.1} parent=1 // pred_check_branch
      %24 = sbr.rel (0) target = $region9
    $region8: #{tpu_custom_call.1} parent=1 // pred_region
      %s26 = ssub.s32 8192, 8192
      %27 = vsyncadd [#allocation6], %s26
      %s28 = sshll.u32 [#allocation5], 4
      %s29 = int_to_ptr.vmem [resolvable:$true] %s28
      %34 = dma.hbm_to_vmem [thread:$0]  %s1, 8192, %s29, [#allocation6], 256, 256, 16
    $region9: #{tpu_custom_call.1} parent=1 // pred_fallthru
      _
    // Predicated region
    $region10: #{tpu_custom_call.1} parent=1 // pred_check
      _
    $region11: #{tpu_custom_call.1} parent=1 // pred_check_branch
      %36 = sbr.rel (0) target = $region13
    $region12: #{tpu_custom_call.1} parent=1 // pred_region
      %s38 = ssub.s32 8192, 8192
      %39 = vsyncadd [#allocation6], %s38
      %s40 = sshll.u32 [#allocation7], 4
      %s41 = int_to_ptr.vmem [resolvable:$true] %s40
      %46 = dma.hbm_to_vmem [thread:$0]  %s2, 8192, %s41, [#allocation6], 256, 256, 16
    $region13: #{tpu_custom_call.1} parent=1 // pred_fallthru
      _
    // Predicated region
    $region14: #{tpu_custom_call.1} parent=1 // pred_check
      _
    $region15: #{tpu_custom_call.1} parent=1 // pred_check_branch
      %48 = sbr.rel (0) target = $region17
    $region16: #{tpu_custom_call.1} parent=1 // pred_region
      %49 = dma.done [#allocation3], 256
    $region17: #{tpu_custom_call.1} parent=1 // pred_fallthru
      _
    // Predicated region
    $region18: #{tpu_custom_call.1} parent=1 // pred_check
      _
    $region19: #{tpu_custom_call.1} parent=1 // pred_check_branch
      %51 = sbr.rel (0) target = $region21
    $region20: #{tpu_custom_call.1} parent=1 // pred_region
      %52 = dma.done [#allocation6], 8192
    $region21: #{tpu_custom_call.1} parent=1 // pred_fallthru
      _
    // Predicated region
    $region22: #{tpu_custom_call.1} parent=1 // pred_check
      _
    $region23: #{tpu_custom_call.1} parent=1 // pred_check_branch
      %54 = sbr.rel (0) target = $region25
    $region24: #{tpu_custom_call.1} parent=1 // pred_region
      %55 = dma.done [#allocation6], 8192
    $region25: #{tpu_custom_call.1} parent=1 // pred_fallthru
      _
    %v56 = vld [vmem:[#allocation2] sm:$0xff]
    %v57 = vld [vmem:[#allocation2 + $0x8] sm:$0xff]
    %v60 = vcombine.high %v56, %v56
    %v61 = vcombine.high %v57, %v57
    %vm64 = vcmask 1043456
    %v65 = vsel %vm64, %v56, 0.0
    %v66 = vrot.slane %v65, 4
    %v67 = vadd.f32 %v65, %v66
    %v68 = vrot.slane %v67, 2
    %v69 = vadd.f32 %v67, %v68
    %v70 = vrot.slane %v69, 1
    %v71 = vadd.f32 %v69, %v70
    %v72 = vsel %vm64, %v60, 0.0
    %v73 = vrot.slane %v72, 4
    %v74 = vadd.f32 %v72, %v73
    %v75 = vrot.slane %v74, 2
    %v76 = vadd.f32 %v74, %v75
    %v77 = vrot.slane %v76, 1
    %v78 = vadd.f32 %v76, %v77
    %v79 = vsel %vm64, %v57, 0.0
    %v80 = vrot.slane %v79, 4
    %v81 = vadd.f32 %v79, %v80
    %v82 = vrot.slane %v81, 2
    %v83 = vadd.f32 %v81, %v82
    %v84 = vrot.slane %v83, 1
    %v85 = vadd.f32 %v83, %v84
    %v86 = vsel %vm64, %v61, 0.0
    %v87 = vrot.slane %v86, 4
    %v88 = vadd.f32 %v86, %v87
    %v89 = vrot.slane %v88, 2
    %v90 = vadd.f32 %v88, %v89
    %v91 = vrot.slane %v90, 1
    %v92 = vadd.f32 %v90, %v91
    %v93 = vrcp.pop 4.0
    %v94 = vmul.f32 %v71, %v93
    %v95 = vmul.f32 %v78, %v93
    %v96 = vmul.f32 %v85, %v93
    %v97 = vmul.f32 %v92, %v93
    %v98 = vsel %vm64, %v56, -inf
    %v99 = vrot.slane %v98, 4
    %v100 = vmax.f32 %v98, %v99
    %v101 = vrot.slane %v100, 2
    %v102 = vmax.f32 %v100, %v101
    %v103 = vrot.slane %v102, 1
    %v104 = vmax.f32 %v102, %v103
    %v105 = vsel %vm64, %v60, -inf
    %v106 = vrot.slane %v105, 4
    %v107 = vmax.f32 %v105, %v106
    %v108 = vrot.slane %v107, 2
    %v109 = vmax.f32 %v107, %v108
    %v110 = vrot.slane %v109, 1
    %v111 = vmax.f32 %v109, %v110
    %v112 = vsel %vm64, %v57, -inf
    %v113 = vrot.slane %v112, 4
    %v114 = vmax.f32 %v112, %v113
    %v115 = vrot.slane %v114, 2
    %v116 = vmax.f32 %v114, %v115
    %v117 = vrot.slane %v116, 1
    %v118 = vmax.f32 %v116, %v117
    %v119 = vsel %vm64, %v61, -inf
    %v120 = vrot.slane %v119, 4
    %v121 = vmax.f32 %v119, %v120
    %v122 = vrot.slane %v121, 2
    %v123 = vmax.f32 %v121, %v122
    %v124 = vrot.slane %v123, 1
    %v125 = vmax.f32 %v123, %v124
    %v126 = vld [vmem:[#allocation5] sm:$0xff]
    %v127 = vld [vmem:[#allocation5 + $0x8] sm:$0xff]
    %v128 = vld [vmem:[#allocation5 + $0x10] sm:$0xff]
    %v129 = vld [vmem:[#allocation5 + $0x18] sm:$0xff]
    %v130 = vld [vmem:[#allocation5 + $0x20] sm:$0xff]
    %v131 = vld [vmem:[#allocation5 + $0x28] sm:$0xff]
    %v132 = vld [vmem:[#allocation5 + $0x30] sm:$0xff]
    %v133 = vld [vmem:[#allocation5 + $0x38] sm:$0xff]
    %v134 = vld [vmem:[#allocation5 + $0x40] sm:$0xff]
    %v135 = vld [vmem:[#allocation5 + $0x48] sm:$0xff]
    %v136 = vld [vmem:[#allocation5 + $0x50] sm:$0xff]
    %v137 = vld [vmem:[#allocation5 + $0x58] sm:$0xff]
    %v138 = vld [vmem:[#allocation5 + $0x60] sm:$0xff]
    %v139 = vld [vmem:[#allocation5 + $0x68] sm:$0xff]
    %v140 = vld [vmem:[#allocation5 + $0x70] sm:$0xff]
    %v141 = vld [vmem:[#allocation5 + $0x78] sm:$0xff]
    %v142 = vld [vmem:[#allocation5 + $0x80] sm:$0xff]
    %v143 = vld [vmem:[#allocation5 + $0x88] sm:$0xff]
    %v144 = vld [vmem:[#allocation5 + $0x90] sm:$0xff]
    %v145 = vld [vmem:[#allocation5 + $0x98] sm:$0xff]
    %v146 = vld [vmem:[#allocation5 + $0xa0] sm:$0xff]
    %v147 = vld [vmem:[#allocation5 + $0xa8] sm:$0xff]
    %v148 = vld [vmem:[#allocation5 + $0xb0] sm:$0xff]
    %v149 = vld [vmem:[#allocation5 + $0xb8] sm:$0xff]
    %v150 = vld [vmem:[#allocation5 + $0xc0] sm:$0xff]
    %v151 = vld [vmem:[#allocation5 + $0xc8] sm:$0xff]
    %v152 = vld [vmem:[#allocation5 + $0xd0] sm:$0xff]
    %v153 = vld [vmem:[#allocation5 + $0xd8] sm:$0xff]
    %v154 = vld [vmem:[#allocation5 + $0xe0] sm:$0xff]
    %v155 = vld [vmem:[#allocation5 + $0xe8] sm:$0xff]
    %v156 = vld [vmem:[#allocation5 + $0xf0] sm:$0xff]
    %v157 = vld [vmem:[#allocation5 + $0xf8] sm:$0xff]
    %v158 = vld [vmem:[#allocation5 + $0x100] sm:$0xff]
    %v159 = vld [vmem:[#allocation5 + $0x108] sm:$0xff]
    %v160 = vld [vmem:[#allocation5 + $0x110] sm:$0xff]
    %v161 = vld [vmem:[#allocation5 + $0x118] sm:$0xff]
    %v162 = vld [vmem:[#allocation5 + $0x120] sm:$0xff]
    %v163 = vld [vmem:[#allocation5 + $0x128] sm:$0xff]
    %v164 = vld [vmem:[#allocation5 + $0x130] sm:$0xff]
    %v165 = vld [vmem:[#allocation5 + $0x138] sm:$0xff]
    %v166 = vld [vmem:[#allocation5 + $0x140] sm:$0xff]
    %v167 = vld [vmem:[#allocation5 + $0x148] sm:$0xff]
    %v168 = vld [vmem:[#allocation5 + $0x150] sm:$0xff]
    %v169 = vld [vmem:[#allocation5 + $0x158] sm:$0xff]
    %v170 = vld [vmem:[#allocation5 + $0x160] sm:$0xff]
    %v171 = vld [vmem:[#allocation5 + $0x168] sm:$0xff]
    %v172 = vld [vmem:[#allocation5 + $0x170] sm:$0xff]
    %v173 = vld [vmem:[#allocation5 + $0x178] sm:$0xff]
    %v174 = vld [vmem:[#allocation5 + $0x180] sm:$0xff]
    %v175 = vld [vmem:[#allocation5 + $0x188] sm:$0xff]
    %v176 = vld [vmem:[#allocation5 + $0x190] sm:$0xff]
    %v177 = vld [vmem:[#allocation5 + $0x198] sm:$0xff]
    %v178 = vld [vmem:[#allocation5 + $0x1a0] sm:$0xff]
    %v179 = vld [vmem:[#allocation5 + $0x1a8] sm:$0xff]
    %v180 = vld [vmem:[#allocation5 + $0x1b0] sm:$0xff]
    %v181 = vld [vmem:[#allocation5 + $0x1b8] sm:$0xff]
    %v182 = vld [vmem:[#allocation5 + $0x1c0] sm:$0xff]
    %v183 = vld [vmem:[#allocation5 + $0x1c8] sm:$0xff]
    %v184 = vld [vmem:[#allocation5 + $0x1d0] sm:$0xff]
    %v185 = vld [vmem:[#allocation5 + $0x1d8] sm:$0xff]
    %v186 = vld [vmem:[#allocation5 + $0x1e0] sm:$0xff]
    %v187 = vld [vmem:[#allocation5 + $0x1e8] sm:$0xff]
    %v188 = vld [vmem:[#allocation5 + $0x1f0] sm:$0xff]
    %v189 = vld [vmem:[#allocation5 + $0x1f8] sm:$0xff]
    %v190 = vld [vmem:[#allocation7] sm:$0xff]
    %v191 = vld [vmem:[#allocation7 + $0x8] sm:$0xff]
    %v192 = vld [vmem:[#allocation7 + $0x10] sm:$0xff]
    %v193 = vld [vmem:[#allocation7 + $0x18] sm:$0xff]
    %v194 = vld [vmem:[#allocation7 + $0x20] sm:$0xff]
    %v195 = vld [vmem:[#allocation7 + $0x28] sm:$0xff]
    %v196 = vld [vmem:[#allocation7 + $0x30] sm:$0xff]
    %v197 = vld [vmem:[#allocation7 + $0x38] sm:$0xff]
    %v198 = vld [vmem:[#allocation7 + $0x40] sm:$0xff]
    %v199 = vld [vmem:[#allocation7 + $0x48] sm:$0xff]
    %v200 = vld [vmem:[#allocation7 + $0x50] sm:$0xff]
    %v201 = vld [vmem:[#allocation7 + $0x58] sm:$0xff]
    %v202 = vld [vmem:[#allocation7 + $0x60] sm:$0xff]
    %v203 = vld [vmem:[#allocation7 + $0x68] sm:$0xff]
    %v204 = vld [vmem:[#allocation7 + $0x70] sm:$0xff]
    %v205 = vld [vmem:[#allocation7 + $0x78] sm:$0xff]
    %v206 = vld [vmem:[#allocation7 + $0x80] sm:$0xff]
    %v207 = vld [vmem:[#allocation7 + $0x88] sm:$0xff]
    %v208 = vld [vmem:[#allocation7 + $0x90] sm:$0xff]
    %v209 = vld [vmem:[#allocation7 + $0x98] sm:$0xff]
    %v210 = vld [vmem:[#allocation7 + $0xa0] sm:$0xff]
    %v211 = vld [vmem:[#allocation7 + $0xa8] sm:$0xff]
    %v212 = vld [vmem:[#allocation7 + $0xb0] sm:$0xff]
    %v213 = vld [vmem:[#allocation7 + $0xb8] sm:$0xff]
    %v214 = vld [vmem:[#allocation7 + $0xc0] sm:$0xff]
    %v215 = vld [vmem:[#allocation7 + $0xc8] sm:$0xff]
    %v216 = vld [vmem:[#allocation7 + $0xd0] sm:$0xff]
    %v217 = vld [vmem:[#allocation7 + $0xd8] sm:$0xff]
    %v218 = vld [vmem:[#allocation7 + $0xe0] sm:$0xff]
    %v219 = vld [vmem:[#allocation7 + $0xe8] sm:$0xff]
    %v220 = vld [vmem:[#allocation7 + $0xf0] sm:$0xff]
    %v221 = vld [vmem:[#allocation7 + $0xf8] sm:$0xff]
    %v222 = vld [vmem:[#allocation7 + $0x100] sm:$0xff]
    %v223 = vld [vmem:[#allocation7 + $0x108] sm:$0xff]
    %v224 = vld [vmem:[#allocation7 + $0x110] sm:$0xff]
    %v225 = vld [vmem:[#allocation7 + $0x118] sm:$0xff]
    %v226 = vld [vmem:[#allocation7 + $0x120] sm:$0xff]
    %v227 = vld [vmem:[#allocation7 + $0x128] sm:$0xff]
    %v228 = vld [vmem:[#allocation7 + $0x130] sm:$0xff]
    %v229 = vld [vmem:[#allocation7 + $0x138] sm:$0xff]
    %v230 = vld [vmem:[#allocation7 + $0x140] sm:$0xff]
    %v231 = vld [vmem:[#allocation7 + $0x148] sm:$0xff]
    %v232 = vld [vmem:[#allocation7 + $0x150] sm:$0xff]
    %v233 = vld [vmem:[#allocation7 + $0x158] sm:$0xff]
    %v234 = vld [vmem:[#allocation7 + $0x160] sm:$0xff]
    %v235 = vld [vmem:[#allocation7 + $0x168] sm:$0xff]
    %v236 = vld [vmem:[#allocation7 + $0x170] sm:$0xff]
    %v237 = vld [vmem:[#allocation7 + $0x178] sm:$0xff]
    %v238 = vld [vmem:[#allocation7 + $0x180] sm:$0xff]
    %v239 = vld [vmem:[#allocation7 + $0x188] sm:$0xff]
    %v240 = vld [vmem:[#allocation7 + $0x190] sm:$0xff]
    %v241 = vld [vmem:[#allocation7 + $0x198] sm:$0xff]
    %v242 = vld [vmem:[#allocation7 + $0x1a0] sm:$0xff]
    %v243 = vld [vmem:[#allocation7 + $0x1a8] sm:$0xff]
    %v244 = vld [vmem:[#allocation7 + $0x1b0] sm:$0xff]
    %v245 = vld [vmem:[#allocation7 + $0x1b8] sm:$0xff]
    %v246 = vld [vmem:[#allocation7 + $0x1c0] sm:$0xff]
    %v247 = vld [vmem:[#allocation7 + $0x1c8] sm:$0xff]
    %v248 = vld [vmem:[#allocation7 + $0x1d0] sm:$0xff]
    %v249 = vld [vmem:[#allocation7 + $0x1d8] sm:$0xff]
    %v250 = vld [vmem:[#allocation7 + $0x1e0] sm:$0xff]
    %v251 = vld [vmem:[#allocation7 + $0x1e8] sm:$0xff]
    %v252 = vld [vmem:[#allocation7 + $0x1f0] sm:$0xff]
    %v253 = vld [vmem:[#allocation7 + $0x1f8] sm:$0xff]
    %vm258 = vcmask 1041409
    %v259 = vsel %vm258, %v118, %v104
    %v260 = vsel %vm258, %v125, %v111
    %263 = vmatprep.subr.mxu0 %v191
    %264 = vmatpush1.msra.mxu0 %v190
    %265 = vmatprep.subr.mxu0 %v193
    %266 = vmatpush1.msra.mxu0 %v192
    %267 = vmatprep.subr.mxu0 %v195
    %268 = vmatpush1.msra.mxu0 %v194
    %269 = vmatprep.subr.mxu0 %v197
    %270 = vmatpush1.msra.mxu0 %v196
    %271 = vmatprep.subr.mxu0 %v199
    %272 = vmatpush1.msra.mxu0 %v198
    %273 = vmatprep.subr.mxu0 %v201
    %274 = vmatpush1.msra.mxu0 %v200
    %275 = vmatprep.subr.mxu0 %v203
    %276 = vmatpush1.msra.mxu0 %v202
    %277 = vmatprep.subr.mxu0 %v205
    %278 = vmatpush1.msra.mxu0 %v204
    %279 = vmatprep.subr.mxu0 %v207
    %280 = vmatpush1.msra.mxu0 %v206
    %281 = vmatprep.subr.mxu0 %v209
    %282 = vmatpush1.msra.mxu0 %v208
    %283 = vmatprep.subr.mxu0 %v211
    %284 = vmatpush1.msra.mxu0 %v210
    %285 = vmatprep.subr.mxu0 %v213
    %286 = vmatpush1.msra.mxu0 %v212
    %287 = vmatprep.subr.mxu0 %v215
    %288 = vmatpush1.msra.mxu0 %v214
    %289 = vmatprep.subr.mxu0 %v217
    %290 = vmatpush1.msra.mxu0 %v216
    %291 = vmatprep.subr.mxu0 %v219
    %292 = vmatpush1.msra.mxu0 %v218
    %293 = vmatprep.subr.mxu0 %v221
    %294 = vmatpush1.msra.mxu0 %v220
    %295 = vmatprep.subr.mxu0 %v223
    %296 = vmatpush1.msra.mxu0 %v222
    %297 = vmatprep.subr.mxu0 %v225
    %298 = vmatpush1.msra.mxu0 %v224
    %299 = vmatprep.subr.mxu0 %v227
    %300 = vmatpush1.msra.mxu0 %v226
    %301 = vmatprep.subr.mxu0 %v229
    %302 = vmatpush1.msra.mxu0 %v228
    %303 = vmatprep.subr.mxu0 %v231
    %304 = vmatpush1.msra.mxu0 %v230
    %305 = vmatprep.subr.mxu0 %v233
    %306 = vmatpush1.msra.mxu0 %v232
    %307 = vmatprep.subr.mxu0 %v235
    %308 = vmatpush1.msra.mxu0 %v234
    %309 = vmatprep.subr.mxu0 %v237
    %310 = vmatpush1.msra.mxu0 %v236
    %311 = vmatprep.subr.mxu0 %v239
    %312 = vmatpush1.msra.mxu0 %v238
    %313 = vmatprep.subr.mxu0 %v241
    %314 = vmatpush1.msra.mxu0 %v240
    %315 = vmatprep.subr.mxu0 %v243
    %316 = vmatpush1.msra.mxu0 %v242
    %317 = vmatprep.subr.mxu0 %v245
    %318 = vmatpush1.msra.mxu0 %v244
    %319 = vmatprep.subr.mxu0 %v247
    %320 = vmatpush1.msra.mxu0 %v246
    %321 = vmatprep.subr.mxu0 %v249
    %322 = vmatpush1.msra.mxu0 %v248
    %323 = vmatprep.subr.mxu0 %v251
    %324 = vmatpush1.msra.mxu0 %v250
    %325 = vmatprep.subr.mxu0 %v253
    %326 = vmatpush1.msra.mxu0 %v252
    %327 = vmatprep.mubr.f32.mxu0 %v260
    %328 = vmatmul.mubr.f32.gmra.mrb[0].mxu0 %v259
    %v329 = vpop.f32.mrb[0].mxu0
    %v330 = vadd.f32 0.0, %v329
    %v331 = vpop.f32.mrb[0].mxu0
    %v332 = vadd.f32 0.0, %v331
    %333 = vdwg.mxu0
    %v338 = vsel %vm258, %v96, %v94
    %v339 = vsel %vm258, %v97, %v95
    %342 = vmatprep.subr.mxu0 %v127
    %343 = vmatpush1.msra.mxu0 %v126
    %344 = vmatprep.subr.mxu0 %v129
    %345 = vmatpush1.msra.mxu0 %v128
    %346 = vmatprep.subr.mxu0 %v131
    %347 = vmatpush1.msra.mxu0 %v130
    %348 = vmatprep.subr.mxu0 %v133
    %349 = vmatpush1.msra.mxu0 %v132
    %350 = vmatprep.subr.mxu0 %v135
    %351 = vmatpush1.msra.mxu0 %v134
    %352 = vmatprep.subr.mxu0 %v137
    %353 = vmatpush1.msra.mxu0 %v136
    %354 = vmatprep.subr.mxu0 %v139
    %355 = vmatpush1.msra.mxu0 %v138
    %356 = vmatprep.subr.mxu0 %v141
    %357 = vmatpush1.msra.mxu0 %v140
    %358 = vmatprep.subr.mxu0 %v143
    %359 = vmatpush1.msra.mxu0 %v142
    %360 = vmatprep.subr.mxu0 %v145
    %361 = vmatpush1.msra.mxu0 %v144
    %362 = vmatprep.subr.mxu0 %v147
    %363 = vmatpush1.msra.mxu0 %v146
    %364 = vmatprep.subr.mxu0 %v149
    %365 = vmatpush1.msra.mxu0 %v148
    %366 = vmatprep.subr.mxu0 %v151
    %367 = vmatpush1.msra.mxu0 %v150
    %368 = vmatprep.subr.mxu0 %v153
    %369 = vmatpush1.msra.mxu0 %v152
    %370 = vmatprep.subr.mxu0 %v155
    %371 = vmatpush1.msra.mxu0 %v154
    %372 = vmatprep.subr.mxu0 %v157
    %373 = vmatpush1.msra.mxu0 %v156
    %374 = vmatprep.subr.mxu0 %v159
    %375 = vmatpush1.msra.mxu0 %v158
    %376 = vmatprep.subr.mxu0 %v161
    %377 = vmatpush1.msra.mxu0 %v160
    %378 = vmatprep.subr.mxu0 %v163
    %379 = vmatpush1.msra.mxu0 %v162
    %380 = vmatprep.subr.mxu0 %v165
    %381 = vmatpush1.msra.mxu0 %v164
    %382 = vmatprep.subr.mxu0 %v167
    %383 = vmatpush1.msra.mxu0 %v166
    %384 = vmatprep.subr.mxu0 %v169
    %385 = vmatpush1.msra.mxu0 %v168
    %386 = vmatprep.subr.mxu0 %v171
    %387 = vmatpush1.msra.mxu0 %v170
    %388 = vmatprep.subr.mxu0 %v173
    %389 = vmatpush1.msra.mxu0 %v172
    %390 = vmatprep.subr.mxu0 %v175
    %391 = vmatpush1.msra.mxu0 %v174
    %392 = vmatprep.subr.mxu0 %v177
    %393 = vmatpush1.msra.mxu0 %v176
    %394 = vmatprep.subr.mxu0 %v179
    %395 = vmatpush1.msra.mxu0 %v178
    %396 = vmatprep.subr.mxu0 %v181
    %397 = vmatpush1.msra.mxu0 %v180
    %398 = vmatprep.subr.mxu0 %v183
    %399 = vmatpush1.msra.mxu0 %v182
    %400 = vmatprep.subr.mxu0 %v185
    %401 = vmatpush1.msra.mxu0 %v184
    %402 = vmatprep.subr.mxu0 %v187
    %403 = vmatpush1.msra.mxu0 %v186
    %404 = vmatprep.subr.mxu0 %v189
    %405 = vmatpush1.msra.mxu0 %v188
    %406 = vmatprep.mubr.f32.mxu0 %v339
    %407 = vmatmul.mubr.f32.gmra.mrb[0].mxu0 %v338
    %v408 = vpop.f32.mrb[0].mxu0
    %v409 = vadd.f32 %v330, %v408
    %v410 = vpop.f32.mrb[0].mxu0
    %v411 = vadd.f32 %v332, %v410
    %412 = vdwg.mxu0
    %v413 = vxor.u32 %v409, 2147483648
    %v414 = vxor.u32 %v411, 2147483648
    %v415 = vmul.f32 %v413, 1.442695
    %v416 = vpow.pop %v415
    %v417 = vmul.f32 %v414, 1.442695
    %v418 = vpow.pop %v417
    %v419 = vadd.f32 %v416, 1.0
    %v420 = vadd.f32 %v418, 1.0
    %v421 = vrcp.pop %v419
    %v422 = vmul.f32 1.0, %v421
    %v423 = vrcp.pop %v420
    %v424 = vmul.f32 1.0, %v423
    %v427 = vcombine.low %v422, %v424
    %v429 = vunpack.c.l.s4 1983009808
    %v430 = vunpack.c.0.s8 %v429
    %v431 = vlaneseq
    %v432 = vshrl.u32 %v431, 7
    %v433 = vsub.s32 %v430, %v432
    %v434 = vrot.slane %v427, %v433
    %436 = vst [vmem:[#allocation8] sm:$0xf] %v434
    // Predicated region
    $region26: #{tpu_custom_call.1} parent=1 // pred_check
      _
    $region27: #{tpu_custom_call.1} parent=1 // pred_check_branch
      %438 = sbr.rel (0) target = $region29
    $region28: #{tpu_custom_call.1} parent=1 // pred_region
      %s440 = ssub.s32 64, 64
      %441 = vsyncadd [#allocation4], %s440
      %s443 = sshll.u32 [#allocation8], 4
      %s444 = int_to_ptr.vmem [resolvable:$true] %s443
      %446 = dma.vmem_to_hbm [thread:$0]  %s444, 64, %s3, [#allocation4]
    $region29: #{tpu_custom_call.1} parent=1 // pred_fallthru
      _
    // Predicated region
    $region30: #{tpu_custom_call.1} parent=1 // pred_check
      _
    $region31: #{tpu_custom_call.1} parent=1 // pred_check_branch
      %448 = sbr.rel (0) target = $region33
    $region32: #{tpu_custom_call.1} parent=1 // pred_region
      %449 = dma.done [#allocation4], 64
    $region33: #{tpu_custom_call.1} parent=1 // pred_fallthru
      _
    %450 = vsyncpa [#allocation3], 1
    %451 = vsyncpa [#allocation6], 1
    %452 = vsyncpa [#allocation4], 1

</llo_original>
